<compile_context>
chip_gen: v5e
topology: v5e:2x2
jax: 0.10.0
libtpu: 0.0.40
codegen_flags: <defaults>
</compile_context>

<pallas_src>
import math
from functools import partial

import jax
import jax.numpy as jnp
from jax.experimental import pallas as pl
from jax.experimental.pallas import tpu as pltpu


def _round_up(x, m):
    return ((x + m - 1) // m) * m


def _pick_tiles(k128, n128, cap_k=512, cap_n=512, *,
                step_overhead_s=0.35e-6, hbm_bw=1.2e12,
                min_n_tiles=2, vmem_budget=24 << 20):
    """Jointly pick (tk, tn) (multiples of 128, <= caps).

    K / N are padded UP to a multiple of the tile; candidates are scored with
    a per-step-overhead + HBM-bytes model so awkward sizes (640, 896, ...) get
    large tiles instead of degrading to 128.  Double-buffered weight tiles are
    kept under `vmem_budget` (conservative for v7x's 64 MiB VMEM / v5e's
    16 MiB default scoped limit).  A soft preference keeps >= `min_n_tiles`
    tiles on the "parallel" N axis when the layer is big enough (v7x dual-TC).
    """
    best = None
    for tk in range(128, cap_k + 1, 128):
        kp = _round_up(k128, tk)
        for tn in range(128, cap_n + 1, 128):
            npad = _round_up(n128, tn)
            # two f32 weight streams, double-buffered
            if 2 * 2 * tk * tn * 4 > vmem_budget:
                continue
            n_steps = (kp // tk) * (npad // tn)
            t = n_steps * step_overhead_s + (2 * kp * npad * 4) / hbm_bw
            if n128 >= min_n_tiles * 128 and (npad // tn) < min_n_tiles:
                t *= 1.15  # soft penalty: single N tile idles one TC on v7x
            key = (t, -(tk * tn))
            if best is None or key < best[0]:
                best = (key, tk, tn, kp, npad)
    _, tk, tn, kp, npad = best
    return tk, tn, kp, npad


def _noisy_linear_kernel(x_ref, xeps_ref, wmuT_ref, wsigT_ref,
                         bmu_ref, bsig_ref, eps_out_ref, o_ref, acc_sig_ref):
    k = pl.program_id(1)

    @pl.when(k == 0)
    def _():
        o_ref[...] = jnp.zeros_like(o_ref)
        acc_sig_ref[...] = jnp.zeros_like(acc_sig_ref)

    # Factorised noise: y = x @ mu^T + eps_out * ((x*eps_in) @ sigma^T) + b.
    # mu path accumulates directly into the resident f32 output block.
    o_ref[...] += jnp.dot(x_ref[...], wmuT_ref[...],
                          preferred_element_type=jnp.float32)
    acc_sig_ref[...] += jnp.dot(xeps_ref[...], wsigT_ref[...],
                                preferred_element_type=jnp.float32)

    @pl.when(k == pl.num_programs(1) - 1)
    def _():
        bias = bmu_ref[...] + bsig_ref[...] * eps_out_ref[...]          # (1, tn)
        o_ref[...] = o_ref[...] + eps_out_ref[...] * acc_sig_ref[...] + bias


def prepare_noisy_linear_params(weight_mu, weight_sigma, bias_mu, bias_sigma,
                                cap_k=512, cap_n=512, weights_dtype=None):
    """One-time (per parameter update) layout prep, hoisted out of forward().

    Transposes weights to (in_f, out_f) so out_f is the lane axis in-kernel
    and zero-pads everything to tile multiples.  The forward path then reads
    these directly from HBM with no per-call transpose/pad traffic.
    `weights_dtype=jnp.bfloat16` halves weight-stream HBM bytes (numerics
    change vs the f32 reference, usually fine for exploration noise).
    """
    out_f, in_f = weight_mu.shape
    k128 = _round_up(in_f, 128)
    n128 = _round_up(out_f, 128)
    tk, tn, K_pad, N_pad = _pick_tiles(k128, n128, cap_k, cap_n)
    dk, dn = K_pad - in_f, N_pad - out_f
    wdt = weights_dtype if weights_dtype is not None else jnp.float32

    wmuT = jnp.pad(weight_mu.T.astype(wdt), ((0, dk), (0, dn)))          # (K_pad, N_pad)
    wsigT = jnp.pad(weight_sigma.T.astype(wdt), ((0, dk), (0, dn)))      # (K_pad, N_pad)
    bmu_row = jnp.pad(bias_mu.reshape(1, out_f).astype(jnp.float32),
                      ((0, 0), (0, dn)))                                 # (1, N_pad)
    bsig_row = jnp.pad(bias_sigma.reshape(1, out_f).astype(jnp.float32),
                       ((0, 0), (0, dn)))                                # (1, N_pad)
    return dict(wmuT=wmuT, wsigT=wsigT, bmu_row=bmu_row, bsig_row=bsig_row,
                in_f=in_f, out_f=out_f, tk=tk, tn=tn)


@partial(jax.jit, static_argnames=("out_f", "tk", "tn"))
def _noisy_linear_fwd(x, wmuT, wsigT, bmu_row, bsig_row, eps_in, eps_out,
                      *, out_f, tk, tn):
    B, in_f = x.shape
    K_pad, N_pad = wmuT.shape
    B_pad = _round_up(max(B, 1), 8)          # f32 sublane alignment
    dk = K_pad - in_f

    x_f32 = x.astype(jnp.float32)
    x_p = jnp.pad(x_f32, ((0, B_pad - B), (0, dk)))                       # (B_pad, K_pad)
    eps_in_row = jnp.pad(eps_in.reshape(1, in_f).astype(jnp.float32),
                         ((0, 0), (0, dk)))                               # (1, K_pad)
    x_eps = x_p * eps_in_row                                              # (B_pad, K_pad), O(B*K)
    eps_out_row = jnp.pad(eps_out.reshape(1, out_f).astype(jnp.float32),
                          ((0, 0), (0, N_pad - out_f)))                   # (1, N_pad)

    grid = (N_pad // tn, K_pad // tk)         # N parallel, K (reduction) last

    itemsize_w = jnp.dtype(wmuT.dtype).itemsize
    cost = pl.CostEstimate(
        flops=int(2 * 2 * B_pad * K_pad * N_pad),
        transcendentals=0,
        bytes_accessed=int(2 * K_pad * N_pad * itemsize_w
                           + (2 * B_pad * K_pad + B_pad * N_pad + 3 * N_pad) * 4),
    )

    # VMEM estimate: double-buffered weight + x tiles, resident out + acc,
    # bias/eps rows.  Keep explicit headroom, stay well under v7x's 64 MiB.
    vmem_est = (2 * 2 * tk * tn * itemsize_w
                + 2 * 2 * B_pad * tk * 4
                + 2 * B_pad * tn * 4
                + 3 * 2 * 8 * tn * 4)
    vmem_limit = int(min(48 << 20, max(2 * vmem_est, 16 << 20)))

    out = pl.pallas_call(
        _noisy_linear_kernel,
        out_shape=jax.ShapeDtypeStruct((B_pad, N_pad), jnp.float32),
        grid_spec=pltpu.PrefetchScalarGridSpec(
            num_scalar_prefetch=0,
            grid=grid,
            in_specs=[
                pl.BlockSpec((B_pad, tk), lambda n, k: (0, k)),   # x
                pl.BlockSpec((B_pad, tk), lambda n, k: (0, k)),   # x * eps_in
                pl.BlockSpec((tk, tn), lambda n, k: (k, n)),      # weight_mu^T
                pl.BlockSpec((tk, tn), lambda n, k: (k, n)),      # weight_sigma^T
                pl.BlockSpec((1, tn), lambda n, k: (0, n)),       # bias_mu row
                pl.BlockSpec((1, tn), lambda n, k: (0, n)),       # bias_sigma row
                pl.BlockSpec((1, tn), lambda n, k: (0, n)),       # eps_out row
            ],
            out_specs=pl.BlockSpec((B_pad, tn), lambda n, k: (0, n)),
            scratch_shapes=[pltpu.VMEM((B_pad, tn), jnp.float32)],  # sigma-path acc
        ),
        compiler_params=pltpu.CompilerParams(
            dimension_semantics=("parallel", "arbitrary"),
            vmem_limit_bytes=vmem_limit),
        cost_estimate=cost,
    )(x_p, x_eps, wmuT, wsigT, bmu_row, bsig_row, eps_out_row)

    return out[:B, :out_f]


def noisy_linear(x, params, eps_in, eps_out):
    """Forward pass.  `params` comes from prepare_noisy_linear_params()."""
    return _noisy_linear_fwd(x, params["wmuT"], params["wsigT"],
                             params["bmu_row"], params["bsig_row"],
                             eps_in, eps_out,
                             out_f=params["out_f"],
                             tk=params["tk"], tn=params["tn"])


# ----------------------------- test harness ---------------------------------

def _f_noise(t):
    # factorised-noise transform: sign(x) * sqrt(|x|)
    return jnp.sign(t) * jnp.sqrt(jnp.abs(t))


def _reference(x, weight_mu, weight_sigma, bias_mu, bias_sigma, eps_in, eps_out):
    w = weight_mu + weight_sigma * (eps_out @ eps_in)
    b = bias_mu + bias_sigma * eps_out.squeeze()
    return x @ w.T + b


def _run_case(key, B, in_f, out_f, sigma_init=0.5, cap_k=512, cap_n=512):
    k_wmu, k_bmu, k_ein, k_eout, k_x = jax.random.split(key, 5)
    bound = 1.0 / math.sqrt(in_f)
    weight_mu = jax.random.uniform(k_wmu, (out_f, in_f), jnp.float32, -bound, bound)
    bias_mu = jax.random.uniform(k_bmu, (out_f,), jnp.float32, -bound, bound)
    weight_sigma = jnp.full((out_f, in_f), sigma_init / math.sqrt(in_f), jnp.float32)
    bias_sigma = jnp.full((out_f,), sigma_init / math.sqrt(in_f), jnp.float32)
    # reset_noise(): eps_in (1, in_f), eps_out (out_f, 1), transformed by _f.
    # TODO(synk): noise sampling (reset_noise) stays host-side with jax.random,
    # matching the module where forward() only consumes precomputed eps buffers.
    eps_in = _f_noise(jax.random.normal(k_ein, (1, in_f), jnp.float32))
    eps_out = _f_noise(jax.random.normal(k_eout, (out_f, 1), jnp.float32))
    x = jax.random.normal(k_x, (B, in_f), jnp.float32)

    # Layout prep is done once (per parameter update), not per forward call.
    params = prepare_noisy_linear_params(weight_mu, weight_sigma, bias_mu,
                                         bias_sigma, cap_k=cap_k, cap_n=cap_n)
    y = noisy_linear(x, params, eps_in, eps_out)
    y = jax.block_until_ready(y)
    y_ref = _reference(x, weight_mu, weight_sigma, bias_mu, bias_sigma,
                       eps_in, eps_out)

    assert y.shape == (B, out_f)
    assert jnp.allclose(y, y_ref, atol=1e-4, rtol=1e-4), \
        f"mismatch vs reference for (B={B}, in_f={in_f}, out_f={out_f})"


if __name__ == "__main__":
    root = jax.random.PRNGKey(0)
    k0, k1, k2 = jax.random.split(root, 3)
    # aligned small case (matches the module's typical hidden sizes)
    _run_case(k0, B=8, in_f=32, out_f=64)
    # non-aligned case exercising the B/K/N padding + masked-free epilogue path
    _run_case(k1, B=4, in_f=100, out_f=72)
    # force a 2x2 (N, K) grid (tile caps lowered) to exercise the multi-k
    # accumulator init/epilogue and output revisiting across n on hardware
    _run_case(k2, B=8, in_f=256, out_f=256, cap_k=128, cap_n=128)
    print("KERNEL_OK")
</pallas_src>

<mosaic_0001>
module attributes {stable_mosaic.version = 11 : i64} {
  func.func @_noisy_linear_kernel(%arg0: i32, %arg1: i32, %arg2: memref<8x128xf32, #tpu.memory_space<vmem>>, %arg3: memref<8x128xf32, #tpu.memory_space<vmem>>, %arg4: memref<128x128xf32, #tpu.memory_space<vmem>>, %arg5: memref<128x128xf32, #tpu.memory_space<vmem>>, %arg6: memref<1x128xf32, #tpu.memory_space<vmem>>, %arg7: memref<1x128xf32, #tpu.memory_space<vmem>>, %arg8: memref<1x128xf32, #tpu.memory_space<vmem>>, %arg9: memref<8x128xf32, #tpu.memory_space<vmem>>, %arg10: memref<8x128xf32, #tpu.memory_space<vmem>>) attributes {dimension_semantics = [#tpu.dimension_semantics<parallel>, #tpu.dimension_semantics<arbitrary>], iteration_bounds = array<i64: 1, 1>, scalar_prefetch = 0 : i64, scratch_operands = 1 : i64, tpu.core_type = #tpu.core_type<tc>, window_params = [{transform_indices = @transform_0, window_bounds = array<i64: 8, 128>}, {transform_indices = @transform_1, window_bounds = array<i64: 8, 128>}, {transform_indices = @transform_2, window_bounds = array<i64: 128, 128>}, {transform_indices = @transform_3, window_bounds = array<i64: 128, 128>}, {transform_indices = @transform_4, window_bounds = array<i64: 1, 128>}, {transform_indices = @transform_5, window_bounds = array<i64: 1, 128>}, {transform_indices = @transform_6, window_bounds = array<i64: 1, 128>}, {transform_indices = @transform_7, window_bounds = array<i64: 8, 128>}]} {
    %c0_i32 = arith.constant 0 : i32
    %0 = arith.cmpi eq, %arg1, %c0_i32 : i32
    %1 = arith.extui %0 : i1 to i32
    %c0_i32_0 = arith.constant 0 : i32
    %2 = arith.cmpi ne, %1, %c0_i32_0 : i32
    scf.if %2 {
      %cst_19 = arith.constant 0.000000e+00 : f32
      %18 = vector.broadcast %cst_19 : f32 to vector<8x128xf32>
      %c0_20 = arith.constant 0 : index
      %c0_21 = arith.constant 0 : index
      %19 = vector.load %arg9[%c0_20, %c0_21] : memref<8x128xf32, #tpu.memory_space<vmem>>, vector<8x128xf32>
      tpu.vector_store %arg9[%c0_20, %c0_21], %18 {strides = array<i32>} : memref<8x128xf32, #tpu.memory_space<vmem>>, vector<8x128xf32>,
      %cst_22 = arith.constant 0.000000e+00 : f32
      %20 = vector.broadcast %cst_22 : f32 to vector<8x128xf32>
      %c0_23 = arith.constant 0 : index
      %c0_24 = arith.constant 0 : index
      %21 = vector.load %arg10[%c0_23, %c0_24] : memref<8x128xf32, #tpu.memory_space<vmem>>, vector<8x128xf32>
      tpu.vector_store %arg10[%c0_23, %c0_24], %20 {strides = array<i32>} : memref<8x128xf32, #tpu.memory_space<vmem>>, vector<8x128xf32>,
    } else {
    }
    %c0 = arith.constant 0 : index
    %c0_1 = arith.constant 0 : index
    %3 = vector.load %arg9[%c0, %c0_1] : memref<8x128xf32, #tpu.memory_space<vmem>>, vector<8x128xf32>
    %c0_2 = arith.constant 0 : index
    %c0_3 = arith.constant 0 : index
    %4 = vector.load %arg2[%c0_2, %c0_3] : memref<8x128xf32, #tpu.memory_space<vmem>>, vector<8x128xf32>
    %c0_4 = arith.constant 0 : index
    %c0_5 = arith.constant 0 : index
    %5 = vector.load %arg4[%c0_4, %c0_5] : memref<128x128xf32, #tpu.memory_space<vmem>>, vector<128x128xf32>
    %cst = arith.constant dense<0.000000e+00> : vector<8x128xf32>
    %6 = tpu.matmul %4, %5, %cst {dimension_numbers = #tpu.dot_dimension_numbers<[1], [0], [0], [1], [0, 0, 1, 1], [], []>} : vector<8x128xf32>, vector<128x128xf32>, vector<8x128xf32> -> vector<8x128xf32>
    %7 = arith.addf %3, %6 : vector<8x128xf32>
    %c0_6 = arith.constant 0 : index
    %c0_7 = arith.constant 0 : index
    %8 = vector.load %arg9[%c0_6, %c0_7] : memref<8x128xf32, #tpu.memory_space<vmem>>, vector<8x128xf32>
    tpu.vector_store %arg9[%c0_6, %c0_7], %7 {strides = array<i32>} : memref<8x128xf32, #tpu.memory_space<vmem>>, vector<8x128xf32>,
    %c0_8 = arith.constant 0 : index
    %c0_9 = arith.constant 0 : index
    %9 = vector.load %arg10[%c0_8, %c0_9] : memref<8x128xf32, #tpu.memory_space<vmem>>, vector<8x128xf32>
    %c0_10 = arith.constant 0 : index
    %c0_11 = arith.constant 0 : index
    %10 = vector.load %arg3[%c0_10, %c0_11] : memref<8x128xf32, #tpu.memory_space<vmem>>, vector<8x128xf32>
    %c0_12 = arith.constant 0 : index
    %c0_13 = arith.constant 0 : index
    %11 = vector.load %arg5[%c0_12, %c0_13] : memref<128x128xf32, #tpu.memory_space<vmem>>, vector<128x128xf32>
    %cst_14 = arith.constant dense<0.000000e+00> : vector<8x128xf32>
    %12 = tpu.matmul %10, %11, %cst_14 {dimension_numbers = #tpu.dot_dimension_numbers<[1], [0], [0], [1], [0, 0, 1, 1], [], []>} : vector<8x128xf32>, vector<128x128xf32>, vector<8x128xf32> -> vector<8x128xf32>
    %13 = arith.addf %9, %12 : vector<8x128xf32>
    %c0_15 = arith.constant 0 : index
    %c0_16 = arith.constant 0 : index
    %14 = vector.load %arg10[%c0_15, %c0_16] : memref<8x128xf32, #tpu.memory_space<vmem>>, vector<8x128xf32>
    tpu.vector_store %arg10[%c0_15, %c0_16], %13 {strides = array<i32>} : memref<8x128xf32, #tpu.memory_space<vmem>>, vector<8x128xf32>,
    %c0_i32_17 = arith.constant 0 : i32
    %15 = arith.cmpi eq, %arg1, %c0_i32_17 : i32
    %16 = arith.extui %15 : i1 to i32
    %c0_i32_18 = arith.constant 0 : i32
    %17 = arith.cmpi ne, %16, %c0_i32_18 : i32
    scf.if %17 {
      %c0_19 = arith.constant 0 : index
      %c0_20 = arith.constant 0 : index
      %18 = vector.load %arg6[%c0_19, %c0_20] : memref<1x128xf32, #tpu.memory_space<vmem>>, vector<1x128xf32>
      %c0_21 = arith.constant 0 : index
      %c0_22 = arith.constant 0 : index
      %19 = vector.load %arg7[%c0_21, %c0_22] : memref<1x128xf32, #tpu.memory_space<vmem>>, vector<1x128xf32>
      %c0_23 = arith.constant 0 : index
      %c0_24 = arith.constant 0 : index
      %20 = vector.load %arg8[%c0_23, %c0_24] : memref<1x128xf32, #tpu.memory_space<vmem>>, vector<1x128xf32>
      %21 = arith.mulf %19, %20 : vector<1x128xf32>
      %22 = arith.addf %18, %21 : vector<1x128xf32>
      %c0_25 = arith.constant 0 : index
      %c0_26 = arith.constant 0 : index
      %23 = vector.load %arg9[%c0_25, %c0_26] : memref<8x128xf32, #tpu.memory_space<vmem>>, vector<8x128xf32>
      %c0_27 = arith.constant 0 : index
      %c0_28 = arith.constant 0 : index
      %24 = vector.load %arg8[%c0_27, %c0_28] : memref<1x128xf32, #tpu.memory_space<vmem>>, vector<1x128xf32>
      %c0_29 = arith.constant 0 : index
      %c0_30 = arith.constant 0 : index
      %25 = vector.load %arg10[%c0_29, %c0_30] : memref<8x128xf32, #tpu.memory_space<vmem>>, vector<8x128xf32>
      %26 = vector.broadcast %24 : vector<1x128xf32> to vector<8x128xf32>
      %27 = arith.mulf %26, %25 : vector<8x128xf32>
      %28 = arith.addf %23, %27 : vector<8x128xf32>
      %29 = vector.broadcast %22 : vector<1x128xf32> to vector<8x128xf32>
      %30 = arith.addf %28, %29 : vector<8x128xf32>
      %c0_31 = arith.constant 0 : index
      %c0_32 = arith.constant 0 : index
      %31 = vector.load %arg9[%c0_31, %c0_32] : memref<8x128xf32, #tpu.memory_space<vmem>>, vector<8x128xf32>
      tpu.vector_store %arg9[%c0_31, %c0_32], %30 {strides = array<i32>} : memref<8x128xf32, #tpu.memory_space<vmem>>, vector<8x128xf32>,
    } else {
    }
    return
  }
  func.func @transform_0(%arg0: i32, %arg1: i32) -> (i32, i32) {
    %c0_i32 = arith.constant 0 : i32
    %c0_i32_0 = arith.constant 0 : i32
    return %c0_i32, %arg1 : i32, i32
  }
  func.func @transform_1(%arg0: i32, %arg1: i32) -> (i32, i32) {
    %c0_i32 = arith.constant 0 : i32
    %c0_i32_0 = arith.constant 0 : i32
    return %c0_i32, %arg1 : i32, i32
  }
  func.func @transform_2(%arg0: i32, %arg1: i32) -> (i32, i32) {
    %c0_i32 = arith.constant 0 : i32
    return %arg1, %arg0 : i32, i32
  }
  func.func @transform_3(%arg0: i32, %arg1: i32) -> (i32, i32) {
    %c0_i32 = arith.constant 0 : i32
    return %arg1, %arg0 : i32, i32
  }
  func.func @transform_4(%arg0: i32, %arg1: i32) -> (i32, i32) {
    %c0_i32 = arith.constant 0 : i32
    %c0_i32_0 = arith.constant 0 : i32
    return %c0_i32, %arg0 : i32, i32
  }
  func.func @transform_5(%arg0: i32, %arg1: i32) -> (i32, i32) {
    %c0_i32 = arith.constant 0 : i32
    %c0_i32_0 = arith.constant 0 : i32
    return %c0_i32, %arg0 : i32, i32
  }
  func.func @transform_6(%arg0: i32, %arg1: i32) -> (i32, i32) {
    %c0_i32 = arith.constant 0 : i32
    %c0_i32_0 = arith.constant 0 : i32
    return %c0_i32, %arg0 : i32, i32
  }
  func.func @transform_7(%arg0: i32, %arg1: i32) -> (i32, i32) {
    %c0_i32 = arith.constant 0 : i32
    %c0_i32_0 = arith.constant 0 : i32
    return %c0_i32, %arg0 : i32, i32
  }
}

</mosaic_0001>

<llo_original>
// kernel: _noisy_linear_fwd.1
$region0: #{_noisy_linear_fwd.1}
  #allocation0 [shape = 'u32[]', space=smem, size = 0x4, offset = 0x4, fixed_abs, tag = 'smem constant byte address 0x4 - core index']
  #allocation1 [shape = 'u32[72,128]{1,0:T(1,128)}', space=vmem, size = 0x9000, scoped, tag = 'internal scratch']
  #allocation2 [shape = 'f32[8,128]{1,0:T(8,128)}', space=vmem, size = 0x1000, scoped, tag = 'scratch operand']
  %s0 = inlined_call_operand.vmem [shape: f32[8,128], index: 0, kind: input, shape index: {}]
  %s1 = inlined_call_operand.vmem [shape: f32[8,128], index: 1, kind: input, shape index: {}]
  %s2 = inlined_call_operand.hbm [shape: f32[128,128], index: 2, kind: input, shape index: {}]
  %s3 = inlined_call_operand.hbm [shape: f32[128,128], index: 3, kind: input, shape index: {}]
  %s4 = inlined_call_operand.vmem [shape: f32[1,128], index: 4, kind: input, shape index: {}]
  %s5 = inlined_call_operand.vmem [shape: f32[1,128], index: 5, kind: input, shape index: {}]
  %s6 = inlined_call_operand.vmem [shape: f32[1,128], index: 6, kind: input, shape index: {}]
  %s7 = inlined_call_operand.hbm [shape: f32[8,128], index: 7, kind: output, shape index: {}]
  %s8 = sld [smem:[#allocation0]]
  $region54: #{_noisy_linear_fwd.1} parent=0
    _
  %s10 = ssub.s32 1, %s8
  %s11 = scalar_select 0, %s10, %s8
  $region1: #{_noisy_linear_fwd.1} parent=0
    #allocation3 [shape = 'u8[65536]{0}', space=vmem, size = 0x10000, scoped, tag = 'input window, operand 2, single buffered']
    #allocation4 [shape = 's32[1]{0}', space=sflag, size = 0x4, scoped, tag = 'scoped memory for _noisy_linear_fwd.1']
    #allocation5 [shape = 's32[1]{0}', space=sflag, size = 0x4, scoped, tag = 'scoped memory for _noisy_linear_fwd.1']
    #allocation6 [shape = 'u8[65536]{0}', space=vmem, size = 0x10000, scoped, tag = 'input window, operand 3, single buffered']
    #allocation7 [shape = 's32[1]{0}', space=sflag, size = 0x4, scoped, tag = 'scoped memory for _noisy_linear_fwd.1']
    #allocation8 [shape = 'u8[4096]{0}', space=vmem, size = 0x1000, scoped, tag = 'output window, operand 0, single buffered']
    %12 = vsyncpa [#allocation4], 0
    %13 = vsyncpa [#allocation7], 0
    %14 = vsyncpa [#allocation5], 0
    // Predicated region
    $region2: #{_noisy_linear_fwd.1} parent=1 // pred_check
      _
    $region3: #{_noisy_linear_fwd.1} parent=1 // pred_check_branch
      %16 = sbr.rel (0) target = $region5
    $region4: #{_noisy_linear_fwd.1} parent=1 // pred_region
      _
    $region5: #{_noisy_linear_fwd.1} parent=1 // pred_fallthru
      _
    // Predicated region
    $region6: #{_noisy_linear_fwd.1} parent=1 // pred_check
      _
    $region7: #{_noisy_linear_fwd.1} parent=1 // pred_check_branch
      %18 = sbr.rel (0) target = $region9
    $region8: #{_noisy_linear_fwd.1} parent=1 // pred_region
      _
    $region9: #{_noisy_linear_fwd.1} parent=1 // pred_fallthru
      _
    // Predicated region
    $region10: #{_noisy_linear_fwd.1} parent=1 // pred_check
      _
    $region11: #{_noisy_linear_fwd.1} parent=1 // pred_check_branch
      %20 = sbr.rel (0) target = $region13
    $region12: #{_noisy_linear_fwd.1} parent=1 // pred_region
      %22 = vsyncadd [#allocation4], 0
      %s23 = sshll.u32 %s2, 4
      %s24 = int_to_ptr.hbm [resolvable:$true] %s23
      %s25 = sshll.u32 [#allocation3], 4
      %s26 = int_to_ptr.vmem [resolvable:$true] %s25
      %31 = dma.hbm_to_vmem [thread:$0]  %s24, 2048, %s26, [#allocation4], 128, 128, 8
    $region13: #{_noisy_linear_fwd.1} parent=1 // pred_fallthru
      _
    // Predicated region
    $region14: #{_noisy_linear_fwd.1} parent=1 // pred_check
      _
    $region15: #{_noisy_linear_fwd.1} parent=1 // pred_check_branch
      %33 = sbr.rel (0) target = $region17
    $region16: #{_noisy_linear_fwd.1} parent=1 // pred_region
      %35 = vsyncadd [#allocation7], 0
      %s36 = sshll.u32 %s3, 4
      %s37 = int_to_ptr.hbm [resolvable:$true] %s36
      %s38 = sshll.u32 [#allocation6], 4
      %s39 = int_to_ptr.vmem [resolvable:$true] %s38
      %44 = dma.hbm_to_vmem [thread:$0]  %s37, 2048, %s39, [#allocation7], 128, 128, 8
    $region17: #{_noisy_linear_fwd.1} parent=1 // pred_fallthru
      _
    // Predicated region
    $region18: #{_noisy_linear_fwd.1} parent=1 // pred_check
      _
    $region19: #{_noisy_linear_fwd.1} parent=1 // pred_check_branch
      %46 = sbr.rel (0) target = $region21
    $region20: #{_noisy_linear_fwd.1} parent=1 // pred_region
      _
    $region21: #{_noisy_linear_fwd.1} parent=1 // pred_fallthru
      _
    // Predicated region
    $region22: #{_noisy_linear_fwd.1} parent=1 // pred_check
      _
    $region23: #{_noisy_linear_fwd.1} parent=1 // pred_check_branch
      %48 = sbr.rel (0) target = $region25
    $region24: #{_noisy_linear_fwd.1} parent=1 // pred_region
      _
    $region25: #{_noisy_linear_fwd.1} parent=1 // pred_fallthru
      _
    // Predicated region
    $region26: #{_noisy_linear_fwd.1} parent=1 // pred_check
      _
    $region27: #{_noisy_linear_fwd.1} parent=1 // pred_check_branch
      %50 = sbr.rel (0) target = $region29
    $region28: #{_noisy_linear_fwd.1} parent=1 // pred_region
      _
    $region29: #{_noisy_linear_fwd.1} parent=1 // pred_fallthru
      _
    // Predicated region
    $region30: #{_noisy_linear_fwd.1} parent=1 // pred_check
      _
    $region31: #{_noisy_linear_fwd.1} parent=1 // pred_check_branch
      %52 = sbr.rel (0) target = $region33
    $region32: #{_noisy_linear_fwd.1} parent=1 // pred_region
      %54 = dma.done [#allocation4], 2048
    $region33: #{_noisy_linear_fwd.1} parent=1 // pred_fallthru
      _
    // Predicated region
    $region34: #{_noisy_linear_fwd.1} parent=1 // pred_check
      _
    $region35: #{_noisy_linear_fwd.1} parent=1 // pred_check_branch
      %56 = sbr.rel (0) target = $region37
    $region36: #{_noisy_linear_fwd.1} parent=1 // pred_region
      %58 = dma.done [#allocation7], 2048
    $region37: #{_noisy_linear_fwd.1} parent=1 // pred_fallthru
      _
    %p59 = scmp.eq.s32.totalorder 0, 0
    // Predicated region
    $region38: #{_noisy_linear_fwd.1} parent=1 // pred_check
      %p60 = pneg %p59
    $region39: #{_noisy_linear_fwd.1} parent=1 // pred_check_branch
      %62 = sbr.rel (%p60) target = $region41
    $region40: #{_noisy_linear_fwd.1} parent=1 // pred_region
      %63 = vst [vmem:[#allocation8] sm:$0xff] 0.0
      %64 = vst [vmem:[#allocation2] sm:$0xff] 0.0
    $region41: #{_noisy_linear_fwd.1} parent=1 // pred_fallthru
      _
    %v65 = vld [vmem:[#allocation8] sm:$0xff]
    %v66 = vld [vmem:[%s0] sm:$0xff]
    %v67 = vld [vmem:[#allocation3] sm:$0xff]
    %v68 = vld [vmem:[#allocation3 + $0x8] sm:$0xff]
    %v69 = vld [vmem:[#allocation3 + $0x10] sm:$0xff]
    %v70 = vld [vmem:[#allocation3 + $0x18] sm:$0xff]
    %v71 = vld [vmem:[#allocation3 + $0x20] sm:$0xff]
    %v72 = vld [vmem:[#allocation3 + $0x28] sm:$0xff]
    %v73 = vld [vmem:[#allocation3 + $0x30] sm:$0xff]
    %v74 = vld [vmem:[#allocation3 + $0x38] sm:$0xff]
    %v75 = vld [vmem:[#allocation3 + $0x40] sm:$0xff]
    %v76 = vld [vmem:[#allocation3 + $0x48] sm:$0xff]
    %v77 = vld [vmem:[#allocation3 + $0x50] sm:$0xff]
    %v78 = vld [vmem:[#allocation3 + $0x58] sm:$0xff]
    %v79 = vld [vmem:[#allocation3 + $0x60] sm:$0xff]
    %v80 = vld [vmem:[#allocation3 + $0x68] sm:$0xff]
    %v81 = vld [vmem:[#allocation3 + $0x70] sm:$0xff]
    %v82 = vld [vmem:[#allocation3 + $0x78] sm:$0xff]
    %83 = vmatpush.msra.mxu0 %v82
    %84 = vmatpush.msra.mxu0 %v81
    %85 = vmatpush.msra.mxu0 %v80
    %86 = vmatpush.msra.mxu0 %v79
    %87 = vmatpush.msra.mxu0 %v78
    %88 = vmatpush.msra.mxu0 %v77
    %89 = vmatpush.msra.mxu0 %v76
    %90 = vmatpush.msra.mxu0 %v75
    %91 = vmatpush.msra.mxu0 %v74
    %92 = vmatpush.msra.mxu0 %v73
    %93 = vmatpush.msra.mxu0 %v72
    %94 = vmatpush.msra.mxu0 %v71
    %95 = vmatpush.msra.mxu0 %v70
    %96 = vmatpush.msra.mxu0 %v69
    %97 = vmatpush.msra.mxu0 %v68
    %98 = vmatpush.msra.mxu0 %v67
    %99 = vmatmul.f32.gmra.mxu0 %v66
    %v100 = vpop.f32.mrf.mxu0
    %v101 = vadd.f32 0.0, %v100
    %102 = vdwg.mxu0
    %v103 = vadd.f32 %v65, %v101
    %104 = vst [vmem:[#allocation8] sm:$0xff] %v103
    %v105 = vld [vmem:[#allocation2] sm:$0xff]
    %v106 = vld [vmem:[%s1] sm:$0xff]
    %v107 = vld [vmem:[#allocation6] sm:$0xff]
    %v108 = vld [vmem:[#allocation6 + $0x8] sm:$0xff]
    %v109 = vld [vmem:[#allocation6 + $0x10] sm:$0xff]
    %v110 = vld [vmem:[#allocation6 + $0x18] sm:$0xff]
    %v111 = vld [vmem:[#allocation6 + $0x20] sm:$0xff]
    %v112 = vld [vmem:[#allocation6 + $0x28] sm:$0xff]
    %v113 = vld [vmem:[#allocation6 + $0x30] sm:$0xff]
    %v114 = vld [vmem:[#allocation6 + $0x38] sm:$0xff]
    %v115 = vld [vmem:[#allocation6 + $0x40] sm:$0xff]
    %v116 = vld [vmem:[#allocation6 + $0x48] sm:$0xff]
    %v117 = vld [vmem:[#allocation6 + $0x50] sm:$0xff]
    %v118 = vld [vmem:[#allocation6 + $0x58] sm:$0xff]
    %v119 = vld [vmem:[#allocation6 + $0x60] sm:$0xff]
    %v120 = vld [vmem:[#allocation6 + $0x68] sm:$0xff]
    %v121 = vld [vmem:[#allocation6 + $0x70] sm:$0xff]
    %v122 = vld [vmem:[#allocation6 + $0x78] sm:$0xff]
    %123 = vmatpush.msra.mxu0 %v122
    %124 = vmatpush.msra.mxu0 %v121
    %125 = vmatpush.msra.mxu0 %v120
    %126 = vmatpush.msra.mxu0 %v119
    %127 = vmatpush.msra.mxu0 %v118
    %128 = vmatpush.msra.mxu0 %v117
    %129 = vmatpush.msra.mxu0 %v116
    %130 = vmatpush.msra.mxu0 %v115
    %131 = vmatpush.msra.mxu0 %v114
    %132 = vmatpush.msra.mxu0 %v113
    %133 = vmatpush.msra.mxu0 %v112
    %134 = vmatpush.msra.mxu0 %v111
    %135 = vmatpush.msra.mxu0 %v110
    %136 = vmatpush.msra.mxu0 %v109
    %137 = vmatpush.msra.mxu0 %v108
    %138 = vmatpush.msra.mxu0 %v107
    %139 = vmatmul.f32.gmra.mxu0 %v106
    %v140 = vpop.f32.mrf.mxu0
    %v141 = vadd.f32 0.0, %v140
    %142 = vdwg.mxu0
    %v143 = vadd.f32 %v105, %v141
    %144 = vst [vmem:[#allocation2] sm:$0xff] %v143
    // Predicated region
    $region42: #{_noisy_linear_fwd.1} parent=1 // pred_check
      %p145 = pneg %p59
    $region43: #{_noisy_linear_fwd.1} parent=1 // pred_check_branch
      %147 = sbr.rel (%p145) target = $region45
    $region44: #{_noisy_linear_fwd.1} parent=1 // pred_region
      %v148 = vld [vmem:[%s4] sm:$0x1]
      %v149 = vld [vmem:[%s5] sm:$0x1]
      %v150 = vld [vmem:[%s6] sm:$0x1]
      %v151 = vmul.f32 %v149, %v150
      %v152 = vadd.f32 %v148, %v151
      %v153 = vld [vmem:[#allocation8] sm:$0xff]
      %v154 = vld [vmem:[#allocation2] sm:$0xff]
      %v156 = vperm.slane %v150, 0
      %v158 = vmul.f32 %v156, %v154
      %v159 = vadd.f32 %v153, %v158
      %v161 = vperm.slane %v152, 0
      %v163 = vadd.f32 %v159, %v161
      %164 = vst [vmem:[#allocation8] sm:$0xff] %v163
    $region45: #{_noisy_linear_fwd.1} parent=1 // pred_fallthru
      _
    // Predicated region
    $region46: #{_noisy_linear_fwd.1} parent=1 // pred_check
      _
    $region47: #{_noisy_linear_fwd.1} parent=1 // pred_check_branch
      %166 = sbr.rel (0) target = $region49
    $region48: #{_noisy_linear_fwd.1} parent=1 // pred_region
      %168 = vsyncadd [#allocation5], 0
      %s170 = sshll.u32 [#allocation8], 4
      %s171 = int_to_ptr.vmem [resolvable:$true] %s170
      %s172 = sshll.u32 %s7, 4
      %s173 = int_to_ptr.hbm [resolvable:$true] %s172
      %175 = dma.vmem_to_hbm [thread:$0]  %s171, 128, %s173, [#allocation5]
    $region49: #{_noisy_linear_fwd.1} parent=1 // pred_fallthru
      _
    // Predicated region
    $region50: #{_noisy_linear_fwd.1} parent=1 // pred_check
      _
    $region51: #{_noisy_linear_fwd.1} parent=1 // pred_check_branch
      %177 = sbr.rel (0) target = $region53
    $region52: #{_noisy_linear_fwd.1} parent=1 // pred_region
      %179 = dma.done [#allocation5], 128
    $region53: #{_noisy_linear_fwd.1} parent=1 // pred_fallthru
      _
    %180 = vsyncpa [#allocation4], 1
    %181 = vsyncpa [#allocation7], 1
    %182 = vsyncpa [#allocation5], 1

</llo_original>
